<compile_context>
chip_gen: v7x
topology: tpu7x:2x2x1
jax: 0.10.0
libtpu: 0.0.40
codegen_flags: <defaults>
</compile_context>

<pallas_src>
import functools

import jax
import jax.numpy as jnp
from jax.experimental import pallas as pl
from jax.experimental.pallas import tpu as pltpu

Z_DIM = 128                       # ProprioEncoder(128, alpha=1.0)
PROPRIO_DIM = 8                   # fixed input feature dim of the proprio encoder
HIDDEN = (32, 64, 128, 2 * Z_DIM)
DIMS = (PROPRIO_DIM,) + HIDDEN    # (8, 32, 64, 128, 256)
N_LAYERS = 4
PAD = 2 * Z_DIM                   # 256: padded in/out width of the packed slab
NEG_SLOPE = 0.1                   # nn.LeakyReLU(0.1)
DEFAULT_TILE_B = 2048             # big tiles amortize ~0.35us/step grid overhead


def _round_up(n, m):
    return ((n + m - 1) // m) * m


def _leaky_relu(v):
    # max(v, a*v) == LeakyReLU(v) exactly for 0 < a < 1; cheaper than
    # cmp+select on the VALU.
    return jnp.maximum(v, NEG_SLOPE * v)


def proprio_encoder_kernel(x_ref, w_ref, b_ref, o_ref):
    """4-layer MLP on one (tile_b, 8) batch tile.

    w_ref: (4, 256, 256) zero-padded weight slab, resident in VMEM
           (constant index_map -> fetched once, reused every grid step).
    b_ref: (4, 1, 256)   zero-padded f32 bias slab, resident in VMEM.

    Each layer is computed at its TRUE shape by statically slicing the slab,
    so no MXU/VALU work is spent on padded rows/cols.
    """
    h = x_ref[...].astype(w_ref.dtype)          # in-kernel cast (bf16 option)
    for l in range(N_LAYERS):
        k, n = DIMS[l], DIMS[l + 1]
        h = jnp.dot(h, w_ref[l, :k, :n], preferred_element_type=jnp.float32)
        h = _leaky_relu(h + b_ref[l, :, :n])    # f32 bias + activation
        if l < N_LAYERS - 1:
            h = h.astype(w_ref.dtype)           # operand dtype for next dot
    o_ref[...] = h.astype(o_ref.dtype)          # h is (tile_b, 256) here


def init_params(key):
    """Deterministic PyTorch-style Linear init: W ~ U(-1/sqrt(fan_in), ...)."""
    params = []
    for i in range(N_LAYERS):
        key, kw, kb = jax.random.split(key, 3)
        bound = 1.0 / float(DIMS[i]) ** 0.5
        w = jax.random.uniform(kw, (DIMS[i + 1], DIMS[i]), jnp.float32,
                               minval=-bound, maxval=bound)   # (out, in)
        b = jax.random.uniform(kb, (DIMS[i + 1],), jnp.float32,
                               minval=-bound, maxval=bound)
        params.append((w, b))
    return params


def pack_params(params, param_dtype=jnp.float32):
    """One-time parameter prep (call once, OUTSIDE the per-step forward).

    Transposes PyTorch (out, in) weights to (in, out) and zero-pads each layer
    into a single (4, 256, 256) weight slab plus a (4, 1, 256) f32 bias slab,
    so the kernel sees exactly two parameter operands with constant index_maps
    (VMEM-resident across all grid steps).  param_dtype=jnp.bfloat16 keeps MXU
    operands on the fast path on v6e/v7x; accumulation/bias/LeakyReLU stay f32.
    """
    w_slab = jnp.zeros((N_LAYERS, PAD, PAD), param_dtype)
    b_slab = jnp.zeros((N_LAYERS, 1, PAD), jnp.float32)
    for l, (w, b) in enumerate(params):
        wt = jnp.asarray(w, jnp.float32).T                    # (in, out)
        w_slab = w_slab.at[l, : wt.shape[0], : wt.shape[1]].set(
            wt.astype(param_dtype))
        b_slab = b_slab.at[l, 0, : b.shape[0]].set(jnp.asarray(b, jnp.float32))
    return w_slab, b_slab


def local_model_forward(x, packed_params, *, tile_b=DEFAULT_TILE_B,
                        out_dtype=jnp.float32):
    """Forward of LocalModelForVISIONTOUCH with client_number == 2."""
    w_slab, b_slab = packed_params
    B = x.shape[0]
    tile_b = min(tile_b, _round_up(B, 8))      # never exceed (rounded) batch
    grid = (pl.cdiv(B, tile_b),)

    flops_per_row = 2 * sum(DIMS[i] * DIMS[i + 1] for i in range(N_LAYERS))
    param_bytes = (w_slab.size * jnp.dtype(w_slab.dtype).itemsize
                   + b_slab.size * jnp.dtype(b_slab.dtype).itemsize)
    cost = pl.CostEstimate(
        flops=B * flops_per_row,
        transcendentals=0,
        bytes_accessed=B * (PROPRIO_DIM * jnp.dtype(x.dtype).itemsize
                            + PAD * jnp.dtype(out_dtype).itemsize)
                       + param_bytes)

    out2d = pl.pallas_call(
        proprio_encoder_kernel,
        out_shape=jax.ShapeDtypeStruct((B, PAD), out_dtype),
        grid=grid,
        in_specs=[
            pl.BlockSpec((tile_b, PROPRIO_DIM), lambda i: (i, 0)),
            # Constant index_maps -> params resident in VMEM across the grid.
            pl.BlockSpec((N_LAYERS, PAD, PAD), lambda i: (0, 0, 0)),
            pl.BlockSpec((N_LAYERS, 1, PAD), lambda i: (0, 0, 0)),
        ],
        out_specs=pl.BlockSpec((tile_b, PAD), lambda i: (i, 0)),
        compiler_params=pltpu.CompilerParams(
            dimension_semantics=("parallel",),          # megacore split (v7x)
            vmem_limit_bytes=32 * 1024 * 1024),
        cost_estimate=cost,
    )(x, w_slab, b_slab)

    # PyTorch: self.proprio_encoder(proprio).unsqueeze(2).  Keep the Pallas
    # output lane-dense (B, 256); the unsqueeze is a free metadata reshape.
    return out2d[:, :, None]


def _reference_forward(x, params):
    h = x
    for (w, b) in params:
        h = h @ w.T + b
        h = jnp.where(h > 0, h, NEG_SLOPE * h)
    return h[:, :, None]


if __name__ == "__main__":
    key = jax.random.PRNGKey(0)
    kx, kp, kx2 = jax.random.split(key, 3)

    params = init_params(kp)
    packed = pack_params(params)          # one-time packing, outside forward

    fwd = jax.jit(functools.partial(local_model_forward,
                                    tile_b=DEFAULT_TILE_B))

    # Small batch (single grid step), matching the module's toy usage.
    batch = 8
    x_small = jax.random.normal(kx, (batch, PROPRIO_DIM), jnp.float32)
    out_small = fwd(x_small, packed)
    jax.block_until_ready(out_small)
    assert out_small.shape == (batch, 2 * Z_DIM, 1), out_small.shape
    ref_small = _reference_forward(x_small, params)
    assert jnp.allclose(out_small, ref_small, atol=1e-5, rtol=1e-5), \
        "mismatch vs reference (small batch)"

    # Multi-tile batch with a partial last tile: exercises the batch grid,
    # masked stores on the ragged tile and the VMEM-resident weights.
    x_big = jax.random.normal(kx2, (4100, PROPRIO_DIM), jnp.float32)
    out_big = fwd(x_big, packed)
    jax.block_until_ready(out_big)
    ref_big = _reference_forward(x_big, params)
    assert out_big.shape == (4100, 2 * Z_DIM, 1), out_big.shape
    assert jnp.allclose(out_big, ref_big, atol=1e-5, rtol=1e-5), \
        "mismatch vs reference (multi-tile batch)"

    print("KERNEL_OK")
</pallas_src>

<mosaic_0001>
module attributes {stable_mosaic.version = 11 : i64} {
  func.func @proprio_encoder_kernel(%arg0: i32, %arg1: memref<8x8xf32, #tpu.memory_space<vmem>>, %arg2: memref<4x256x256xf32, #tpu.memory_space<vmem>>, %arg3: memref<4x1x256xf32, #tpu.memory_space<vmem>>, %arg4: memref<8x256xf32, #tpu.memory_space<vmem>>) attributes {dimension_semantics = [#tpu.dimension_semantics<parallel>], iteration_bounds = array<i64: 1>, scalar_prefetch = 0 : i64, scratch_operands = 0 : i64, tpu.core_type = #tpu.core_type<tc>, window_params = [{transform_indices = @transform_0, window_bounds = array<i64: 8, 8>}, {pipeline_mode = #tpu.pipeline_mode<synchronous>, transform_indices = @transform_1, window_bounds = array<i64: 4, 256, 256>}, {pipeline_mode = #tpu.pipeline_mode<synchronous>, transform_indices = @transform_2, window_bounds = array<i64: 4, 1, 256>}, {transform_indices = @transform_3, window_bounds = array<i64: 8, 256>}]} {
    %c0 = arith.constant 0 : index
    %c0_0 = arith.constant 0 : index
    %0 = vector.load %arg1[%c0, %c0_0] : memref<8x8xf32, #tpu.memory_space<vmem>>, vector<8x8xf32>
    %c0_1 = arith.constant 0 : index
    %c0_2 = arith.constant 0 : index
    %c0_3 = arith.constant 0 : index
    %1 = vector.load %arg2[%c0_1, %c0_2, %c0_3] : memref<4x256x256xf32, #tpu.memory_space<vmem>>, vector<1x8x32xf32>
    %2 = vector.shape_cast %1 : vector<1x8x32xf32> to vector<8x32xf32>
    %cst = arith.constant dense<0.000000e+00> : vector<8x32xf32>
    %3 = tpu.matmul %0, %2, %cst {dimension_numbers = #tpu.dot_dimension_numbers<[1], [0], [0], [1], [0, 0, 1, 1], [], []>} : vector<8x8xf32>, vector<8x32xf32>, vector<8x32xf32> -> vector<8x32xf32>
    %c0_4 = arith.constant 0 : index
    %c0_5 = arith.constant 0 : index
    %c0_6 = arith.constant 0 : index
    %4 = vector.load %arg3[%c0_4, %c0_5, %c0_6] : memref<4x1x256xf32, #tpu.memory_space<vmem>>, vector<1x1x32xf32>
    %5 = vector.shape_cast %4 : vector<1x1x32xf32> to vector<1x32xf32>
    %6 = vector.broadcast %5 : vector<1x32xf32> to vector<8x32xf32>
    %7 = arith.addf %3, %6 : vector<8x32xf32>
    %cst_7 = arith.constant 1.000000e-01 : f32
    %8 = vector.broadcast %cst_7 : f32 to vector<8x32xf32>
    %9 = arith.mulf %8, %7 : vector<8x32xf32>
    %10 = arith.maximumf %7, %9 : vector<8x32xf32>
    %c1 = arith.constant 1 : index
    %c0_8 = arith.constant 0 : index
    %c0_9 = arith.constant 0 : index
    %11 = vector.load %arg2[%c1, %c0_8, %c0_9] : memref<4x256x256xf32, #tpu.memory_space<vmem>>, vector<1x32x64xf32>
    %12 = vector.shape_cast %11 : vector<1x32x64xf32> to vector<32x64xf32>
    %cst_10 = arith.constant dense<0.000000e+00> : vector<8x64xf32>
    %13 = tpu.matmul %10, %12, %cst_10 {dimension_numbers = #tpu.dot_dimension_numbers<[1], [0], [0], [1], [0, 0, 1, 1], [], []>} : vector<8x32xf32>, vector<32x64xf32>, vector<8x64xf32> -> vector<8x64xf32>
    %c1_11 = arith.constant 1 : index
    %c0_12 = arith.constant 0 : index
    %c0_13 = arith.constant 0 : index
    %14 = vector.load %arg3[%c1_11, %c0_12, %c0_13] : memref<4x1x256xf32, #tpu.memory_space<vmem>>, vector<1x1x64xf32>
    %15 = vector.shape_cast %14 : vector<1x1x64xf32> to vector<1x64xf32>
    %16 = vector.broadcast %15 : vector<1x64xf32> to vector<8x64xf32>
    %17 = arith.addf %13, %16 : vector<8x64xf32>
    %cst_14 = arith.constant 1.000000e-01 : f32
    %18 = vector.broadcast %cst_14 : f32 to vector<8x64xf32>
    %19 = arith.mulf %18, %17 : vector<8x64xf32>
    %20 = arith.maximumf %17, %19 : vector<8x64xf32>
    %c2 = arith.constant 2 : index
    %c0_15 = arith.constant 0 : index
    %c0_16 = arith.constant 0 : index
    %21 = vector.load %arg2[%c2, %c0_15, %c0_16] : memref<4x256x256xf32, #tpu.memory_space<vmem>>, vector<1x64x128xf32>
    %22 = vector.shape_cast %21 : vector<1x64x128xf32> to vector<64x128xf32>
    %cst_17 = arith.constant dense<0.000000e+00> : vector<8x128xf32>
    %23 = tpu.matmul %20, %22, %cst_17 {dimension_numbers = #tpu.dot_dimension_numbers<[1], [0], [0], [1], [0, 0, 1, 1], [], []>} : vector<8x64xf32>, vector<64x128xf32>, vector<8x128xf32> -> vector<8x128xf32>
    %c2_18 = arith.constant 2 : index
    %c0_19 = arith.constant 0 : index
    %c0_20 = arith.constant 0 : index
    %24 = vector.load %arg3[%c2_18, %c0_19, %c0_20] : memref<4x1x256xf32, #tpu.memory_space<vmem>>, vector<1x1x128xf32>
    %25 = vector.shape_cast %24 : vector<1x1x128xf32> to vector<1x128xf32>
    %26 = vector.broadcast %25 : vector<1x128xf32> to vector<8x128xf32>
    %27 = arith.addf %23, %26 : vector<8x128xf32>
    %cst_21 = arith.constant 1.000000e-01 : f32
    %28 = vector.broadcast %cst_21 : f32 to vector<8x128xf32>
    %29 = arith.mulf %28, %27 : vector<8x128xf32>
    %30 = arith.maximumf %27, %29 : vector<8x128xf32>
    %c3 = arith.constant 3 : index
    %c0_22 = arith.constant 0 : index
    %c0_23 = arith.constant 0 : index
    %31 = vector.load %arg2[%c3, %c0_22, %c0_23] : memref<4x256x256xf32, #tpu.memory_space<vmem>>, vector<1x128x256xf32>
    %32 = vector.shape_cast %31 : vector<1x128x256xf32> to vector<128x256xf32>
    %cst_24 = arith.constant dense<0.000000e+00> : vector<8x256xf32>
    %33 = tpu.matmul %30, %32, %cst_24 {dimension_numbers = #tpu.dot_dimension_numbers<[1], [0], [0], [1], [0, 0, 1, 1], [], []>} : vector<8x128xf32>, vector<128x256xf32>, vector<8x256xf32> -> vector<8x256xf32>
    %c3_25 = arith.constant 3 : index
    %c0_26 = arith.constant 0 : index
    %c0_27 = arith.constant 0 : index
    %34 = vector.load %arg3[%c3_25, %c0_26, %c0_27] : memref<4x1x256xf32, #tpu.memory_space<vmem>>, vector<1x1x256xf32>
    %35 = vector.shape_cast %34 : vector<1x1x256xf32> to vector<1x256xf32>
    %36 = vector.broadcast %35 : vector<1x256xf32> to vector<8x256xf32>
    %37 = arith.addf %33, %36 : vector<8x256xf32>
    %cst_28 = arith.constant 1.000000e-01 : f32
    %38 = vector.broadcast %cst_28 : f32 to vector<8x256xf32>
    %39 = arith.mulf %38, %37 : vector<8x256xf32>
    %40 = arith.maximumf %37, %39 : vector<8x256xf32>
    %c0_29 = arith.constant 0 : index
    %c0_30 = arith.constant 0 : index
    %41 = vector.load %arg4[%c0_29, %c0_30] : memref<8x256xf32, #tpu.memory_space<vmem>>, vector<8x256xf32>
    tpu.vector_store %arg4[%c0_29, %c0_30], %40 {strides = array<i32>} : memref<8x256xf32, #tpu.memory_space<vmem>>, vector<8x256xf32>,
    return
  }
  func.func @transform_0(%arg0: i32) -> (i32, i32) {
    %c0_i32 = arith.constant 0 : i32
    %c0_i32_0 = arith.constant 0 : i32
    return %arg0, %c0_i32 : i32, i32
  }
  func.func @transform_1(%arg0: i32) -> (i32, i32, i32) {
    %c0_i32 = arith.constant 0 : i32
    %c0_i32_0 = arith.constant 0 : i32
    %c0_i32_1 = arith.constant 0 : i32
    %c0_i32_2 = arith.constant 0 : i32
    return %c0_i32, %c0_i32_0, %c0_i32_1 : i32, i32, i32
  }
  func.func @transform_2(%arg0: i32) -> (i32, i32, i32) {
    %c0_i32 = arith.constant 0 : i32
    %c0_i32_0 = arith.constant 0 : i32
    %c0_i32_1 = arith.constant 0 : i32
    %c0_i32_2 = arith.constant 0 : i32
    return %c0_i32, %c0_i32_0, %c0_i32_1 : i32, i32, i32
  }
  func.func @transform_3(%arg0: i32) -> (i32, i32) {
    %c0_i32 = arith.constant 0 : i32
    %c0_i32_0 = arith.constant 0 : i32
    return %arg0, %c0_i32 : i32, i32
  }
}

</mosaic_0001>

<llo_original>
// kernel: local_model_forward.1
$region0: #{local_model_forward.1}
  #allocation0 [shape = 'u32[]', space=smem, size = 0x4, offset = 0x4, fixed_abs, tag = 'smem constant byte address 0x4 - core index']
  #allocation1 [shape = 'u32[144,128]{1,0:T(1,128)}', space=vmem, size = 0x12000, scoped, tag = 'internal scratch']
  %s0 = inlined_call_operand.hbm [shape: f32[8,8], index: 0, kind: input, shape index: {}]
  %s1 = inlined_call_operand.hbm [shape: f32[4,256,256], index: 1, kind: input, shape index: {}]
  %s2 = inlined_call_operand.hbm [shape: f32[4,1,256], index: 2, kind: input, shape index: {}]
  %s3 = inlined_call_operand.vmem [shape: f32[8,256], index: 3, kind: output, shape index: {}]
  %s4 = sld [smem:[#allocation0]]
  $region34: #{local_model_forward.1} parent=0
    _
  %s6 = ssub.s32 1, %s4
  %s7 = scalar_select 0, %s6, %s4
  $region1: #{local_model_forward.1} parent=0
    #allocation2 [shape = 'u8[4096]{0}', space=vmem, size = 0x1000, scoped, tag = 'input window, operand 0, single buffered']
    #allocation3 [shape = 's32[1]{0}', space=sflag, size = 0x4, scoped, tag = 'scoped memory for local_model_forward.1']
    #allocation4 [shape = 'u8[1048576]{0}', space=vmem, size = 0x100000, scoped, tag = 'input window, operand 1, single buffered']
    #allocation5 [shape = 's32[1]{0}', space=sflag, size = 0x4, scoped, tag = 'scoped memory for local_model_forward.1']
    #allocation6 [shape = 'u8[4096]{0}', space=vmem, size = 0x1000, scoped, tag = 'input window, operand 2, single buffered']
    %8 = vsyncpa [#allocation3], 0
    %9 = vsyncpa [#allocation5], 0
    // Predicated region
    $region2: #{local_model_forward.1} parent=1 // pred_check
      _
    $region3: #{local_model_forward.1} parent=1 // pred_check_branch
      %11 = sbr.rel (0) target = $region5
    $region4: #{local_model_forward.1} parent=1 // pred_region
      %s13 = ssub.s32 128, 128
      %14 = vsyncadd [#allocation3], %s13
      %s16 = sshll.u32 [#allocation2], 4
      %s17 = int_to_ptr.vmem [resolvable:$true] %s16
      %19 = dma.hbm_to_vmem [thread:$0]  %s0, 128, %s17, [#allocation3]
    $region5: #{local_model_forward.1} parent=1 // pred_fallthru
      _
    // Predicated region
    $region6: #{local_model_forward.1} parent=1 // pred_check
      _
    $region7: #{local_model_forward.1} parent=1 // pred_check_branch
      %21 = sbr.rel (0) target = $region9
    $region8: #{local_model_forward.1} parent=1 // pred_region
      %s23 = ssub.s32 32768, 32768
      %24 = vsyncadd [#allocation5], %s23
      %s25 = sshll.u32 [#allocation4], 4
      %s26 = int_to_ptr.vmem [resolvable:$true] %s25
      %31 = dma.hbm_to_vmem [thread:$0]  %s1, 32768, %s26, [#allocation5], 256, 256, 16
    $region9: #{local_model_forward.1} parent=1 // pred_fallthru
      _
    // Predicated region
    $region10: #{local_model_forward.1} parent=1 // pred_check
      _
    $region11: #{local_model_forward.1} parent=1 // pred_check_branch
      %33 = sbr.rel (0) target = $region13
    $region12: #{local_model_forward.1} parent=1 // pred_region
      %s35 = ssub.s32 128, 128
      %36 = vsyncadd [#allocation5], %s35
      %s37 = sshll.u32 [#allocation6], 4
      %s38 = int_to_ptr.vmem [resolvable:$true] %s37
      %43 = dma.hbm_to_vmem [thread:$0]  %s2, 128, %s38, [#allocation5], 32, 32, 2
    $region13: #{local_model_forward.1} parent=1 // pred_fallthru
      _
    // Predicated region
    $region14: #{local_model_forward.1} parent=1 // pred_check
      _
    $region15: #{local_model_forward.1} parent=1 // pred_check_branch
      %45 = sbr.rel (0) target = $region17
    $region16: #{local_model_forward.1} parent=1 // pred_region
      %46 = dma.done [#allocation3], 128
    $region17: #{local_model_forward.1} parent=1 // pred_fallthru
      _
    // Predicated region
    $region18: #{local_model_forward.1} parent=1 // pred_check
      _
    $region19: #{local_model_forward.1} parent=1 // pred_check_branch
      %48 = sbr.rel (0) target = $region21
    $region20: #{local_model_forward.1} parent=1 // pred_region
      %49 = dma.done [#allocation5], 32768
    $region21: #{local_model_forward.1} parent=1 // pred_fallthru
      _
    // Predicated region
    $region22: #{local_model_forward.1} parent=1 // pred_check
      _
    $region23: #{local_model_forward.1} parent=1 // pred_check_branch
      %51 = sbr.rel (0) target = $region25
    $region24: #{local_model_forward.1} parent=1 // pred_region
      %52 = dma.done [#allocation5], 128
    $region25: #{local_model_forward.1} parent=1 // pred_fallthru
      _
    %v53 = vld [vmem:[#allocation2] sm:$0xff]
    %v54 = vld [vmem:[#allocation4] sm:$0xff]
    %v55 = vld [vmem:[#allocation6] sm:$0x1]
    %v57 = vlaneseq
    %v58 = vshrl.u32 %v57, 7
    %v59 = vsub.s32 0, %v58
    %v60 = vrot.slane %v55, %v59
    %vm62 = vcmask 64512
    %v64 = vsel %vm62, %v53, 0
    %66 = vmatprep.subr.mxu0 0.0
    %67 = vmatpush1.msra.mxu0 %v54
    %68 = vmatprep.subr.mxu0 0.0
    %69 = vmatpush1.msra.mxu0 0.0
    %70 = vmatprep.subr.mxu0 0.0
    %71 = vmatpush1.msra.mxu0 0.0
    %72 = vmatprep.subr.mxu0 0.0
    %73 = vmatpush1.msra.mxu0 0.0
    %74 = vmatprep.subr.mxu0 0.0
    %75 = vmatpush1.msra.mxu0 0.0
    %76 = vmatprep.subr.mxu0 0.0
    %77 = vmatpush1.msra.mxu0 0.0
    %78 = vmatprep.subr.mxu0 0.0
    %79 = vmatpush1.msra.mxu0 0.0
    %80 = vmatprep.subr.mxu0 0.0
    %81 = vmatpush1.msra.mxu0 0.0
    %82 = vmatprep.subr.mxu0 0.0
    %83 = vmatpush1.msra.mxu0 0.0
    %84 = vmatprep.subr.mxu0 0.0
    %85 = vmatpush1.msra.mxu0 0.0
    %86 = vmatprep.subr.mxu0 0.0
    %87 = vmatpush1.msra.mxu0 0.0
    %88 = vmatprep.subr.mxu0 0.0
    %89 = vmatpush1.msra.mxu0 0.0
    %90 = vmatprep.subr.mxu0 0.0
    %91 = vmatpush1.msra.mxu0 0.0
    %92 = vmatprep.subr.mxu0 0.0
    %93 = vmatpush1.msra.mxu0 0.0
    %94 = vmatprep.subr.mxu0 0.0
    %95 = vmatpush1.msra.mxu0 0.0
    %96 = vmatprep.subr.mxu0 0.0
    %97 = vmatpush1.msra.mxu0 0.0
    %98 = vmatprep.subr.mxu0 0.0
    %99 = vmatpush1.msra.mxu0 0.0
    %100 = vmatprep.subr.mxu0 0.0
    %101 = vmatpush1.msra.mxu0 0.0
    %102 = vmatprep.subr.mxu0 0.0
    %103 = vmatpush1.msra.mxu0 0.0
    %104 = vmatprep.subr.mxu0 0.0
    %105 = vmatpush1.msra.mxu0 0.0
    %106 = vmatprep.subr.mxu0 0.0
    %107 = vmatpush1.msra.mxu0 0.0
    %108 = vmatprep.subr.mxu0 0.0
    %109 = vmatpush1.msra.mxu0 0.0
    %110 = vmatprep.subr.mxu0 0.0
    %111 = vmatpush1.msra.mxu0 0.0
    %112 = vmatprep.subr.mxu0 0.0
    %113 = vmatpush1.msra.mxu0 0.0
    %114 = vmatprep.subr.mxu0 0.0
    %115 = vmatpush1.msra.mxu0 0.0
    %116 = vmatprep.subr.mxu0 0.0
    %117 = vmatpush1.msra.mxu0 0.0
    %118 = vmatprep.subr.mxu0 0.0
    %119 = vmatpush1.msra.mxu0 0.0
    %120 = vmatprep.subr.mxu0 0.0
    %121 = vmatpush1.msra.mxu0 0.0
    %122 = vmatprep.subr.mxu0 0.0
    %123 = vmatpush1.msra.mxu0 0.0
    %124 = vmatprep.subr.mxu0 0.0
    %125 = vmatpush1.msra.mxu0 0.0
    %126 = vmatprep.subr.mxu0 0.0
    %127 = vmatpush1.msra.mxu0 0.0
    %128 = vmatprep.subr.mxu0 0.0
    %129 = vmatpush1.msra.mxu0 0.0
    %130 = vmatprep.mubr.f32.mxu0 0.0
    %131 = vmatmul.mubr.f32.gmra.mrb[0].mxu0 %v64
    %v132 = vpop.f32.mrb[0].mxu0
    %v133 = vadd.f32 %v60, %v132
    %v134 = vpop.f32.mrb[0].mxu0
    %135 = vdwg.mxu0
    %v136 = vmul.f32 %v133, 0.1
    %v137 = vmax.f32 %v133, %v136
    %s138 = scalar_lea.vmem [#allocation4], 512
    %v139 = vld [vmem:[%s138] sm:$0xff]
    %v140 = vld [vmem:[%s138 + $0x10] sm:$0xff]
    %v141 = vld [vmem:[%s138 + $0x20] sm:$0xff]
    %v142 = vld [vmem:[%s138 + $0x30] sm:$0xff]
    %s143 = scalar_lea.vmem [#allocation6], 2
    %v144 = vld [vmem:[%s143] sm:$0x1]
    %v146 = vlaneseq
    %v147 = vshrl.u32 %v146, 7
    %v148 = vsub.s32 0, %v147
    %v149 = vrot.slane %v144, %v148
    %vm151 = vcmask 261120
    %v153 = vsel %vm151, %v137, 0
    %155 = vmatprep.subr.mxu0 0.0
    %156 = vmatpush1.msra.mxu0 %v139
    %157 = vmatprep.subr.mxu0 0.0
    %158 = vmatpush1.msra.mxu0 %v140
    %159 = vmatprep.subr.mxu0 0.0
    %160 = vmatpush1.msra.mxu0 %v141
    %161 = vmatprep.subr.mxu0 0.0
    %162 = vmatpush1.msra.mxu0 %v142
    %163 = vmatprep.subr.mxu0 0.0
    %164 = vmatpush1.msra.mxu0 0.0
    %165 = vmatprep.subr.mxu0 0.0
    %166 = vmatpush1.msra.mxu0 0.0
    %167 = vmatprep.subr.mxu0 0.0
    %168 = vmatpush1.msra.mxu0 0.0
    %169 = vmatprep.subr.mxu0 0.0
    %170 = vmatpush1.msra.mxu0 0.0
    %171 = vmatprep.subr.mxu0 0.0
    %172 = vmatpush1.msra.mxu0 0.0
    %173 = vmatprep.subr.mxu0 0.0
    %174 = vmatpush1.msra.mxu0 0.0
    %175 = vmatprep.subr.mxu0 0.0
    %176 = vmatpush1.msra.mxu0 0.0
    %177 = vmatprep.subr.mxu0 0.0
    %178 = vmatpush1.msra.mxu0 0.0
    %179 = vmatprep.subr.mxu0 0.0
    %180 = vmatpush1.msra.mxu0 0.0
    %181 = vmatprep.subr.mxu0 0.0
    %182 = vmatpush1.msra.mxu0 0.0
    %183 = vmatprep.subr.mxu0 0.0
    %184 = vmatpush1.msra.mxu0 0.0
    %185 = vmatprep.subr.mxu0 0.0
    %186 = vmatpush1.msra.mxu0 0.0
    %187 = vmatprep.subr.mxu0 0.0
    %188 = vmatpush1.msra.mxu0 0.0
    %189 = vmatprep.subr.mxu0 0.0
    %190 = vmatpush1.msra.mxu0 0.0
    %191 = vmatprep.subr.mxu0 0.0
    %192 = vmatpush1.msra.mxu0 0.0
    %193 = vmatprep.subr.mxu0 0.0
    %194 = vmatpush1.msra.mxu0 0.0
    %195 = vmatprep.subr.mxu0 0.0
    %196 = vmatpush1.msra.mxu0 0.0
    %197 = vmatprep.subr.mxu0 0.0
    %198 = vmatpush1.msra.mxu0 0.0
    %199 = vmatprep.subr.mxu0 0.0
    %200 = vmatpush1.msra.mxu0 0.0
    %201 = vmatprep.subr.mxu0 0.0
    %202 = vmatpush1.msra.mxu0 0.0
    %203 = vmatprep.subr.mxu0 0.0
    %204 = vmatpush1.msra.mxu0 0.0
    %205 = vmatprep.subr.mxu0 0.0
    %206 = vmatpush1.msra.mxu0 0.0
    %207 = vmatprep.subr.mxu0 0.0
    %208 = vmatpush1.msra.mxu0 0.0
    %209 = vmatprep.subr.mxu0 0.0
    %210 = vmatpush1.msra.mxu0 0.0
    %211 = vmatprep.subr.mxu0 0.0
    %212 = vmatpush1.msra.mxu0 0.0
    %213 = vmatprep.subr.mxu0 0.0
    %214 = vmatpush1.msra.mxu0 0.0
    %215 = vmatprep.subr.mxu0 0.0
    %216 = vmatpush1.msra.mxu0 0.0
    %217 = vmatprep.subr.mxu0 0.0
    %218 = vmatpush1.msra.mxu0 0.0
    %219 = vmatprep.mubr.f32.mxu0 0.0
    %220 = vmatmul.mubr.f32.gmra.mrb[0].mxu0 %v153
    %v221 = vpop.f32.mrb[0].mxu0
    %v222 = vadd.f32 %v149, %v221
    %v223 = vpop.f32.mrb[0].mxu0
    %224 = vdwg.mxu0
    %v225 = vmul.f32 %v222, 0.1
    %v226 = vmax.f32 %v222, %v225
    %s227 = scalar_lea.vmem [#allocation4], 1024
    %v228 = vld [vmem:[%s227] sm:$0xff]
    %v229 = vld [vmem:[%s227 + $0x10] sm:$0xff]
    %v230 = vld [vmem:[%s227 + $0x20] sm:$0xff]
    %v231 = vld [vmem:[%s227 + $0x30] sm:$0xff]
    %v232 = vld [vmem:[%s227 + $0x40] sm:$0xff]
    %v233 = vld [vmem:[%s227 + $0x50] sm:$0xff]
    %v234 = vld [vmem:[%s227 + $0x60] sm:$0xff]
    %v235 = vld [vmem:[%s227 + $0x70] sm:$0xff]
    %s236 = scalar_lea.vmem [#allocation6], 4
    %v237 = vld [vmem:[%s236] sm:$0x1]
    %v239 = vlaneseq
    %v240 = vshrl.u32 %v239, 7
    %v241 = vsub.s32 0, %v240
    %v242 = vrot.slane %v237, %v241
    %vm244 = vcmask 523264
    %v246 = vsel %vm244, %v226, 0
    %248 = vmatprep.subr.mxu0 0.0
    %249 = vmatpush1.msra.mxu0 %v228
    %250 = vmatprep.subr.mxu0 0.0
    %251 = vmatpush1.msra.mxu0 %v229
    %252 = vmatprep.subr.mxu0 0.0
    %253 = vmatpush1.msra.mxu0 %v230
    %254 = vmatprep.subr.mxu0 0.0
    %255 = vmatpush1.msra.mxu0 %v231
    %256 = vmatprep.subr.mxu0 0.0
    %257 = vmatpush1.msra.mxu0 %v232
    %258 = vmatprep.subr.mxu0 0.0
    %259 = vmatpush1.msra.mxu0 %v233
    %260 = vmatprep.subr.mxu0 0.0
    %261 = vmatpush1.msra.mxu0 %v234
    %262 = vmatprep.subr.mxu0 0.0
    %263 = vmatpush1.msra.mxu0 %v235
    %264 = vmatprep.subr.mxu0 0.0
    %265 = vmatpush1.msra.mxu0 0.0
    %266 = vmatprep.subr.mxu0 0.0
    %267 = vmatpush1.msra.mxu0 0.0
    %268 = vmatprep.subr.mxu0 0.0
    %269 = vmatpush1.msra.mxu0 0.0
    %270 = vmatprep.subr.mxu0 0.0
    %271 = vmatpush1.msra.mxu0 0.0
    %272 = vmatprep.subr.mxu0 0.0
    %273 = vmatpush1.msra.mxu0 0.0
    %274 = vmatprep.subr.mxu0 0.0
    %275 = vmatpush1.msra.mxu0 0.0
    %276 = vmatprep.subr.mxu0 0.0
    %277 = vmatpush1.msra.mxu0 0.0
    %278 = vmatprep.subr.mxu0 0.0
    %279 = vmatpush1.msra.mxu0 0.0
    %280 = vmatprep.subr.mxu0 0.0
    %281 = vmatpush1.msra.mxu0 0.0
    %282 = vmatprep.subr.mxu0 0.0
    %283 = vmatpush1.msra.mxu0 0.0
    %284 = vmatprep.subr.mxu0 0.0
    %285 = vmatpush1.msra.mxu0 0.0
    %286 = vmatprep.subr.mxu0 0.0
    %287 = vmatpush1.msra.mxu0 0.0
    %288 = vmatprep.subr.mxu0 0.0
    %289 = vmatpush1.msra.mxu0 0.0
    %290 = vmatprep.subr.mxu0 0.0
    %291 = vmatpush1.msra.mxu0 0.0
    %292 = vmatprep.subr.mxu0 0.0
    %293 = vmatpush1.msra.mxu0 0.0
    %294 = vmatprep.subr.mxu0 0.0
    %295 = vmatpush1.msra.mxu0 0.0
    %296 = vmatprep.subr.mxu0 0.0
    %297 = vmatpush1.msra.mxu0 0.0
    %298 = vmatprep.subr.mxu0 0.0
    %299 = vmatpush1.msra.mxu0 0.0
    %300 = vmatprep.subr.mxu0 0.0
    %301 = vmatpush1.msra.mxu0 0.0
    %302 = vmatprep.subr.mxu0 0.0
    %303 = vmatpush1.msra.mxu0 0.0
    %304 = vmatprep.subr.mxu0 0.0
    %305 = vmatpush1.msra.mxu0 0.0
    %306 = vmatprep.subr.mxu0 0.0
    %307 = vmatpush1.msra.mxu0 0.0
    %308 = vmatprep.subr.mxu0 0.0
    %309 = vmatpush1.msra.mxu0 0.0
    %310 = vmatprep.subr.mxu0 0.0
    %311 = vmatpush1.msra.mxu0 0.0
    %312 = vmatprep.mubr.f32.mxu0 0.0
    %313 = vmatmul.mubr.f32.gmra.mrb[0].mxu0 %v246
    %v314 = vpop.f32.mrb[0].mxu0
    %v315 = vadd.f32 %v242, %v314
    %v316 = vpop.f32.mrb[0].mxu0
    %317 = vdwg.mxu0
    %v318 = vmul.f32 %v315, 0.1
    %v319 = vmax.f32 %v315, %v318
    %s320 = scalar_lea.vmem [#allocation4], 1536
    %v321 = vld [vmem:[%s320] sm:$0xff]
    %v322 = vld [vmem:[%s320 + $0x8] sm:$0xff]
    %v323 = vld [vmem:[%s320 + $0x10] sm:$0xff]
    %v324 = vld [vmem:[%s320 + $0x18] sm:$0xff]
    %v325 = vld [vmem:[%s320 + $0x20] sm:$0xff]
    %v326 = vld [vmem:[%s320 + $0x28] sm:$0xff]
    %v327 = vld [vmem:[%s320 + $0x30] sm:$0xff]
    %v328 = vld [vmem:[%s320 + $0x38] sm:$0xff]
    %v329 = vld [vmem:[%s320 + $0x40] sm:$0xff]
    %v330 = vld [vmem:[%s320 + $0x48] sm:$0xff]
    %v331 = vld [vmem:[%s320 + $0x50] sm:$0xff]
    %v332 = vld [vmem:[%s320 + $0x58] sm:$0xff]
    %v333 = vld [vmem:[%s320 + $0x60] sm:$0xff]
    %v334 = vld [vmem:[%s320 + $0x68] sm:$0xff]
    %v335 = vld [vmem:[%s320 + $0x70] sm:$0xff]
    %v336 = vld [vmem:[%s320 + $0x78] sm:$0xff]
    %v337 = vld [vmem:[%s320 + $0x80] sm:$0xff]
    %v338 = vld [vmem:[%s320 + $0x88] sm:$0xff]
    %v339 = vld [vmem:[%s320 + $0x90] sm:$0xff]
    %v340 = vld [vmem:[%s320 + $0x98] sm:$0xff]
    %v341 = vld [vmem:[%s320 + $0xa0] sm:$0xff]
    %v342 = vld [vmem:[%s320 + $0xa8] sm:$0xff]
    %v343 = vld [vmem:[%s320 + $0xb0] sm:$0xff]
    %v344 = vld [vmem:[%s320 + $0xb8] sm:$0xff]
    %v345 = vld [vmem:[%s320 + $0xc0] sm:$0xff]
    %v346 = vld [vmem:[%s320 + $0xc8] sm:$0xff]
    %v347 = vld [vmem:[%s320 + $0xd0] sm:$0xff]
    %v348 = vld [vmem:[%s320 + $0xd8] sm:$0xff]
    %v349 = vld [vmem:[%s320 + $0xe0] sm:$0xff]
    %v350 = vld [vmem:[%s320 + $0xe8] sm:$0xff]
    %v351 = vld [vmem:[%s320 + $0xf0] sm:$0xff]
    %v352 = vld [vmem:[%s320 + $0xf8] sm:$0xff]
    %s353 = scalar_lea.vmem [#allocation6], 6
    %v354 = vld [vmem:[%s353] sm:$0x3]
    %v356 = vlaneseq
    %v357 = vshrl.u32 %v356, 7
    %v358 = vsub.s32 0, %v357
    %v359 = vrot.slane %v354, %v358
    %v360 = vlaneseq
    %v361 = vshrl.u32 %v360, 7
    %v362 = vsub.s32 1, %v361
    %v363 = vrot.slane %v354, %v362
    %366 = vmatprep.subr.mxu0 %v322
    %367 = vmatpush1.msra.mxu0 %v321
    %368 = vmatprep.subr.mxu0 %v324
    %369 = vmatpush1.msra.mxu0 %v323
    %370 = vmatprep.subr.mxu0 %v326
    %371 = vmatpush1.msra.mxu0 %v325
    %372 = vmatprep.subr.mxu0 %v328
    %373 = vmatpush1.msra.mxu0 %v327
    %374 = vmatprep.subr.mxu0 %v330
    %375 = vmatpush1.msra.mxu0 %v329
    %376 = vmatprep.subr.mxu0 %v332
    %377 = vmatpush1.msra.mxu0 %v331
    %378 = vmatprep.subr.mxu0 %v334
    %379 = vmatpush1.msra.mxu0 %v333
    %380 = vmatprep.subr.mxu0 %v336
    %381 = vmatpush1.msra.mxu0 %v335
    %382 = vmatprep.subr.mxu0 %v338
    %383 = vmatpush1.msra.mxu0 %v337
    %384 = vmatprep.subr.mxu0 %v340
    %385 = vmatpush1.msra.mxu0 %v339
    %386 = vmatprep.subr.mxu0 %v342
    %387 = vmatpush1.msra.mxu0 %v341
    %388 = vmatprep.subr.mxu0 %v344
    %389 = vmatpush1.msra.mxu0 %v343
    %390 = vmatprep.subr.mxu0 %v346
    %391 = vmatpush1.msra.mxu0 %v345
    %392 = vmatprep.subr.mxu0 %v348
    %393 = vmatpush1.msra.mxu0 %v347
    %394 = vmatprep.subr.mxu0 %v350
    %395 = vmatpush1.msra.mxu0 %v349
    %396 = vmatprep.subr.mxu0 %v352
    %397 = vmatpush1.msra.mxu0 %v351
    %398 = vmatprep.subr.mxu0 0.0
    %399 = vmatpush1.msra.mxu0 0.0
    %400 = vmatprep.subr.mxu0 0.0
    %401 = vmatpush1.msra.mxu0 0.0
    %402 = vmatprep.subr.mxu0 0.0
    %403 = vmatpush1.msra.mxu0 0.0
    %404 = vmatprep.subr.mxu0 0.0
    %405 = vmatpush1.msra.mxu0 0.0
    %406 = vmatprep.subr.mxu0 0.0
    %407 = vmatpush1.msra.mxu0 0.0
    %408 = vmatprep.subr.mxu0 0.0
    %409 = vmatpush1.msra.mxu0 0.0
    %410 = vmatprep.subr.mxu0 0.0
    %411 = vmatpush1.msra.mxu0 0.0
    %412 = vmatprep.subr.mxu0 0.0
    %413 = vmatpush1.msra.mxu0 0.0
    %414 = vmatprep.subr.mxu0 0.0
    %415 = vmatpush1.msra.mxu0 0.0
    %416 = vmatprep.subr.mxu0 0.0
    %417 = vmatpush1.msra.mxu0 0.0
    %418 = vmatprep.subr.mxu0 0.0
    %419 = vmatpush1.msra.mxu0 0.0
    %420 = vmatprep.subr.mxu0 0.0
    %421 = vmatpush1.msra.mxu0 0.0
    %422 = vmatprep.subr.mxu0 0.0
    %423 = vmatpush1.msra.mxu0 0.0
    %424 = vmatprep.subr.mxu0 0.0
    %425 = vmatpush1.msra.mxu0 0.0
    %426 = vmatprep.subr.mxu0 0.0
    %427 = vmatpush1.msra.mxu0 0.0
    %428 = vmatprep.subr.mxu0 0.0
    %429 = vmatpush1.msra.mxu0 0.0
    %430 = vmatprep.mubr.f32.mxu0 0.0
    %431 = vmatmul.mubr.f32.gmra.mrb[0].mxu0 %v319
    %v432 = vpop.f32.mrb[0].mxu0
    %v433 = vadd.f32 %v359, %v432
    %v434 = vpop.f32.mrb[0].mxu0
    %v435 = vadd.f32 %v363, %v434
    %436 = vdwg.mxu0
    %v437 = vmul.f32 %v433, 0.1
    %v438 = vmul.f32 %v435, 0.1
    %v439 = vmax.f32 %v433, %v437
    %v440 = vmax.f32 %v435, %v438
    %441 = vst [vmem:[%s3] sm:$0xff] %v439
    %442 = vst [vmem:[%s3 + $0x8] sm:$0xff] %v440
    // Predicated region
    $region26: #{local_model_forward.1} parent=1 // pred_check
      _
    $region27: #{local_model_forward.1} parent=1 // pred_check_branch
      %444 = sbr.rel (0) target = $region29
    $region28: #{local_model_forward.1} parent=1 // pred_region
      _
    $region29: #{local_model_forward.1} parent=1 // pred_fallthru
      _
    // Predicated region
    $region30: #{local_model_forward.1} parent=1 // pred_check
      _
    $region31: #{local_model_forward.1} parent=1 // pred_check_branch
      %446 = sbr.rel (0) target = $region33
    $region32: #{local_model_forward.1} parent=1 // pred_region
      _
    $region33: #{local_model_forward.1} parent=1 // pred_fallthru
      _
    %447 = vsyncpa [#allocation3], 1
    %448 = vsyncpa [#allocation5], 1

</llo_original>
